<compile_context>
chip_gen: v5e
topology: v5e:2x2
jax: 0.10.0
libtpu: 0.0.40
codegen_flags: <defaults>
</compile_context>

<pallas_src>
import functools

import jax
import jax.numpy as jnp
from jax import lax
from jax.experimental import pallas as pl
from jax.experimental.pallas import tpu as pltpu

EPS = 1e-6


def _cdiv(a, b):
    return -(-a // b)


def _round_up(a, m):
    return _cdiv(a, m) * m


def _tpu_vmem_capacity_bytes():
    """Physical VMEM bytes (conservative 64 MiB fallback if query fails)."""
    try:
        info = pltpu.get_tpu_info()
        cap = getattr(info, "vmem_capacity_bytes", None)
        if cap:
            return int(cap)
    except Exception:
        pass
    return 64 * 1024 * 1024


def _gdl_partial_kernel(x_ref, t_ref, st_ref, sxt_ref, sx_ref, *,
                        nt, nth, tn, rem, lane_steps, has_overrun):
    """Accumulate lane-wide per-row partial sums of t, x*t and x.

    Grid = (p_split, nth): p ("parallel") is the TensorCore split, n
    ("arbitrary") walks this core's share of the lane tiles.  Outputs are
    (1, R, 128) resident accumulator blocks, one per p.
    """
    p = pl.program_id(0)
    n = pl.program_id(1)
    g = p * nth + n                       # global lane-tile index

    @pl.when(n == 0)
    def _init():
        z = jnp.zeros(st_ref.shape, st_ref.dtype)
        st_ref[...] = z
        sxt_ref[...] = z
        sx_ref[...] = z

    def lane_fold(v):
        # (R, tn) -> (R, 128) by pairwise halving: VPU adds on lane-tile-aligned
        # slices only (tn = 128 * 2**lane_steps), no cross-lane XLU work.
        w = v
        width = tn
        for _ in range(lane_steps):
            half = width // 2
            w = w[:, :half] + w[:, half:width]
            width = half
        return w

    def load():
        return (x_ref[...].astype(jnp.float32),
                t_ref[...].astype(jnp.float32))

    def accumulate(x, t):
        # Product first so its buffer dies before the other folds (lower peak VMEM).
        sxt_ref[0] += lane_fold(x * t)
        st_ref[0] += lane_fold(t)
        sx_ref[0] += lane_fold(x)

    ragged = rem < tn
    if ragged:
        @pl.when(g < nt - 1)              # all full tiles: no mask work at all
        def _full():
            x, t = load()
            accumulate(x, t)

        @pl.when(g == nt - 1)             # only the last global tile is masked
        def _tail():
            x, t = load()
            valid = lax.broadcasted_iota(jnp.int32, x.shape, 1) < rem
            accumulate(jnp.where(valid, x, 0.0), jnp.where(valid, t, 0.0))
        # Tiles with g >= nt (forced 2-way split overrun) fall through: skipped.
    elif has_overrun:
        @pl.when(g < nt)
        def _full():
            x, t = load()
            accumulate(x, t)
    else:
        x, t = load()
        accumulate(x, t)


@jax.jit
def generalized_dice_loss(inp, tgt):
    assert inp.shape == tgt.shape
    assert inp.ndim >= 2
    B, C = int(inp.shape[0]), int(inp.shape[1])
    S = 1
    for d in inp.shape[2:]:
        S *= int(d)

    x_it = jnp.dtype(inp.dtype).itemsize
    t_it = jnp.dtype(tgt.dtype).itemsize
    in_bytes = x_it + t_it

    # ---- rows: (B, C, S) -> (B*C*k, S//k), free row-major reshape ------------
    sublanes = max(8, 32 // max(1, min(x_it, t_it)))   # 8 for f32, 16 for bf16
    R = B * C
    k = 1
    if R < sublanes:                                    # fill sublanes if S allows
        for cand in range(sublanes // R, 1, -1):
            if S % cand == 0:
                k = cand
                break
    r_eff = R * k
    nf = S // k
    x = inp.reshape(r_eff, nf)
    t = tgt.reshape(r_eff, nf)

    # ---- generation-aware VMEM budget & lane-tile size -----------------------
    vmem_cap = _tpu_vmem_capacity_bytes()
    if vmem_cap >= 96 * 1024 * 1024:        # v5e / v6e: 128 MiB physical VMEM
        budget = 64 * 1024 * 1024
        vmem_limit = 100 * 1024 * 1024
    else:                                   # v7x: 64 MiB physical VMEM
        budget = 28 * 1024 * 1024
        vmem_limit = 48 * 1024 * 1024

    r_pad = _round_up(r_eff, sublanes)      # sublane-padded tile height
    # Per lane column: 2x double-buffered input tiles + ~5 f32 in-kernel temps.
    per_lane_bytes = r_pad * (2 * in_bytes + 20)
    tn_cap = max(128, budget // per_lane_bytes)

    # tn = 128 * 2**m (enables the VPU-only lane fold), <= tn_cap, and chosen so
    # nt >= 2 whenever nf > 128 -> both v7x TensorCores always get tiles.
    tn = 128
    while tn * 2 <= tn_cap and tn * 2 < nf:
        tn *= 2
    lane_steps = (tn // 128).bit_length() - 1

    nt = _cdiv(nf, tn)                      # number of real lane tiles
    p_split = 2 if nt >= 2 else 1           # 2-way TC split whenever possible
    nth = _cdiv(nt, p_split)                # tiles per core (may overrun by 1)
    has_overrun = p_split * nth > nt
    rem = nf - (nt - 1) * tn                # valid width of the last tile (static)

    kernel = functools.partial(
        _gdl_partial_kernel, nt=nt, nth=nth, tn=tn, rem=rem,
        lane_steps=lane_steps, has_overrun=has_overrun)

    def in_idx(pi, ni):
        # Clamp so an overrun step re-fetches (and skips) the last real tile.
        return (0, jnp.minimum(pi * nth + ni, nt - 1))

    in_spec = pl.BlockSpec((r_eff, tn), in_idx)
    acc_spec = pl.BlockSpec((1, r_eff, 128), lambda pi, ni: (pi, 0, 0))
    out_sds = jax.ShapeDtypeStruct((p_split, r_eff, 128), jnp.float32)

    st_p, sxt_p, sx_p = pl.pallas_call(
        kernel,
        out_shape=(out_sds, out_sds, out_sds),
        grid_spec=pltpu.PrefetchScalarGridSpec(
            num_scalar_prefetch=0,
            grid=(p_split, nth),
            in_specs=[in_spec, in_spec],
            out_specs=(acc_spec, acc_spec, acc_spec),
        ),
        compiler_params=pltpu.CompilerParams(
            dimension_semantics=("parallel", "arbitrary"),
            vmem_limit_bytes=vmem_limit,
        ),
    )(x, t)

    # ---- tiny O(B*C) combine (class weights + loss) in plain JAX -------------
    st = jnp.sum(st_p, axis=(0, 2)).reshape(B, C, k).sum(axis=(0, 2))
    sxt = jnp.sum(sxt_p, axis=(0, 2)).reshape(B, C, k).sum(axis=(0, 2))
    sx = jnp.sum(sx_p, axis=(0, 2)).reshape(B, C, k).sum(axis=(0, 2))

    w = 1.0 / jnp.maximum(st * st, EPS)
    numer = jnp.sum(sxt * w)
    denom = jnp.sum((sx + st) * w)          # sum(x+t) == sum(x) + sum(t)
    return 1.0 - 2.0 * numer / jnp.maximum(denom, EPS)


def _reference(inp, tgt):
    C = inp.shape[1]
    perm = (1, 0) + tuple(range(2, inp.ndim))
    x = jnp.transpose(inp, perm).reshape(C, -1).astype(jnp.float32)
    t = jnp.transpose(tgt, perm).reshape(C, -1).astype(jnp.float32)
    st = t.sum(-1)
    w = 1.0 / jnp.maximum(st * st, EPS)
    numer = ((x * t).sum(-1) * w).sum()
    denom = ((x + t).sum(-1) * w).sum()
    return 1.0 - 2.0 * numer / jnp.maximum(denom, EPS)


if __name__ == "__main__":
    def make_case(key, B, C, H, W):
        k1, k2 = jax.random.split(key)
        logits = jax.random.normal(k1, (B, C, H, W), dtype=jnp.float32)
        pred = jax.nn.softmax(logits, axis=1)                  # per-class predictions
        labels = jax.random.randint(k2, (B, H, W), 0, C)
        target = jnp.transpose(jax.nn.one_hot(labels, C, dtype=jnp.float32),
                               (0, 3, 1, 2))                   # one-hot targets
        return pred, target

    key = jax.random.PRNGKey(0)
    ka, kb = jax.random.split(key)

    # Case 1: canonical small shape (B*C == 8 rows, exact 2-tile split).
    pred1, tgt1 = make_case(ka, 2, 4, 16, 16)
    loss1 = generalized_dice_loss(pred1, tgt1)
    jax.block_until_ready(loss1)
    ref1 = _reference(pred1, tgt1)
    assert jnp.allclose(loss1, ref1, rtol=1e-4, atol=1e-5), (loss1, ref1)

    # Case 2: ragged odd shape (exercises the gated tail mask, the forced 2-way
    # TensorCore split and the lane-wide accumulator combine).
    pred2, tgt2 = make_case(kb, 1, 3, 181, 181)
    loss2 = generalized_dice_loss(pred2, tgt2)
    jax.block_until_ready(loss2)
    ref2 = _reference(pred2, tgt2)
    assert jnp.allclose(loss2, ref2, rtol=1e-4, atol=1e-5), (loss2, ref2)

    print("KERNEL_OK")
</pallas_src>

<mosaic_0001>
module attributes {stable_mosaic.version = 11 : i64} {
  func.func @_gdl_partial_kernel(%arg0: i32, %arg1: i32, %arg2: memref<8x128xf32, #tpu.memory_space<vmem>>, %arg3: memref<8x128xf32, #tpu.memory_space<vmem>>, %arg4: memref<1x8x128xf32, #tpu.memory_space<vmem>>, %arg5: memref<1x8x128xf32, #tpu.memory_space<vmem>>, %arg6: memref<1x8x128xf32, #tpu.memory_space<vmem>>) attributes {dimension_semantics = [#tpu.dimension_semantics<parallel>, #tpu.dimension_semantics<arbitrary>], iteration_bounds = array<i64: 2, 1>, scalar_prefetch = 0 : i64, scratch_operands = 0 : i64, tpu.core_type = #tpu.core_type<tc>, window_params = [{transform_indices = @transform_0, window_bounds = array<i64: 8, 128>}, {transform_indices = @transform_1, window_bounds = array<i64: 8, 128>}, {transform_indices = @transform_2, window_bounds = array<i64: 1, 8, 128>}, {transform_indices = @transform_3, window_bounds = array<i64: 1, 8, 128>}, {transform_indices = @transform_4, window_bounds = array<i64: 1, 8, 128>}]} {
    %c0_i32 = arith.constant 0 : i32
    %0 = arith.cmpi eq, %arg1, %c0_i32 : i32
    %1 = arith.extui %0 : i1 to i32
    %c0_i32_0 = arith.constant 0 : i32
    %2 = arith.cmpi ne, %1, %c0_i32_0 : i32
    scf.if %2 {
      %cst = arith.constant 0.000000e+00 : f32
      %24 = vector.broadcast %cst : f32 to vector<1x8x128xf32>
      %c0_22 = arith.constant 0 : index
      %c0_23 = arith.constant 0 : index
      %c0_24 = arith.constant 0 : index
      %25 = vector.load %arg4[%c0_22, %c0_23, %c0_24] : memref<1x8x128xf32, #tpu.memory_space<vmem>>, vector<1x8x128xf32>
      tpu.vector_store %arg4[%c0_22, %c0_23, %c0_24], %24 {strides = array<i32>} : memref<1x8x128xf32, #tpu.memory_space<vmem>>, vector<1x8x128xf32>,
      %c0_25 = arith.constant 0 : index
      %c0_26 = arith.constant 0 : index
      %c0_27 = arith.constant 0 : index
      %26 = vector.load %arg5[%c0_25, %c0_26, %c0_27] : memref<1x8x128xf32, #tpu.memory_space<vmem>>, vector<1x8x128xf32>
      tpu.vector_store %arg5[%c0_25, %c0_26, %c0_27], %24 {strides = array<i32>} : memref<1x8x128xf32, #tpu.memory_space<vmem>>, vector<1x8x128xf32>,
      %c0_28 = arith.constant 0 : index
      %c0_29 = arith.constant 0 : index
      %c0_30 = arith.constant 0 : index
      %27 = vector.load %arg6[%c0_28, %c0_29, %c0_30] : memref<1x8x128xf32, #tpu.memory_space<vmem>>, vector<1x8x128xf32>
      tpu.vector_store %arg6[%c0_28, %c0_29, %c0_30], %24 {strides = array<i32>} : memref<1x8x128xf32, #tpu.memory_space<vmem>>, vector<1x8x128xf32>,
    } else {
    }
    %c0 = arith.constant 0 : index
    %c0_1 = arith.constant 0 : index
    %3 = vector.load %arg2[%c0, %c0_1] : memref<8x128xf32, #tpu.memory_space<vmem>>, vector<8x128xf32>
    %c0_2 = arith.constant 0 : index
    %c0_3 = arith.constant 0 : index
    %4 = vector.load %arg3[%c0_2, %c0_3] : memref<8x128xf32, #tpu.memory_space<vmem>>, vector<8x128xf32>
    %c0_4 = arith.constant 0 : index
    %c0_5 = arith.constant 0 : index
    %c0_6 = arith.constant 0 : index
    %5 = vector.load %arg5[%c0_4, %c0_5, %c0_6] : memref<1x8x128xf32, #tpu.memory_space<vmem>>, vector<1x8x128xf32>
    %6 = vector.shape_cast %5 : vector<1x8x128xf32> to vector<8x128xf32>
    %7 = arith.mulf %3, %4 : vector<8x128xf32>
    %8 = arith.addf %6, %7 : vector<8x128xf32>
    %c0_7 = arith.constant 0 : index
    %c0_8 = arith.constant 0 : index
    %c0_9 = arith.constant 0 : index
    %9 = vector.load %arg5[%c0_7, %c0_8, %c0_9] : memref<1x8x128xf32, #tpu.memory_space<vmem>>, vector<1x8x128xf32>
    %10 = vector.shape_cast %9 : vector<1x8x128xf32> to vector<8x128xf32>
    %11 = vector.shape_cast %8 : vector<8x128xf32> to vector<1x8x128xf32>
    tpu.vector_store %arg5[%c0_7, %c0_8, %c0_9], %11 {strides = array<i32>} : memref<1x8x128xf32, #tpu.memory_space<vmem>>, vector<1x8x128xf32>,
    %c0_10 = arith.constant 0 : index
    %c0_11 = arith.constant 0 : index
    %c0_12 = arith.constant 0 : index
    %12 = vector.load %arg4[%c0_10, %c0_11, %c0_12] : memref<1x8x128xf32, #tpu.memory_space<vmem>>, vector<1x8x128xf32>
    %13 = vector.shape_cast %12 : vector<1x8x128xf32> to vector<8x128xf32>
    %14 = arith.addf %13, %4 : vector<8x128xf32>
    %c0_13 = arith.constant 0 : index
    %c0_14 = arith.constant 0 : index
    %c0_15 = arith.constant 0 : index
    %15 = vector.load %arg4[%c0_13, %c0_14, %c0_15] : memref<1x8x128xf32, #tpu.memory_space<vmem>>, vector<1x8x128xf32>
    %16 = vector.shape_cast %15 : vector<1x8x128xf32> to vector<8x128xf32>
    %17 = vector.shape_cast %14 : vector<8x128xf32> to vector<1x8x128xf32>
    tpu.vector_store %arg4[%c0_13, %c0_14, %c0_15], %17 {strides = array<i32>} : memref<1x8x128xf32, #tpu.memory_space<vmem>>, vector<1x8x128xf32>,
    %c0_16 = arith.constant 0 : index
    %c0_17 = arith.constant 0 : index
    %c0_18 = arith.constant 0 : index
    %18 = vector.load %arg6[%c0_16, %c0_17, %c0_18] : memref<1x8x128xf32, #tpu.memory_space<vmem>>, vector<1x8x128xf32>
    %19 = vector.shape_cast %18 : vector<1x8x128xf32> to vector<8x128xf32>
    %20 = arith.addf %19, %3 : vector<8x128xf32>
    %c0_19 = arith.constant 0 : index
    %c0_20 = arith.constant 0 : index
    %c0_21 = arith.constant 0 : index
    %21 = vector.load %arg6[%c0_19, %c0_20, %c0_21] : memref<1x8x128xf32, #tpu.memory_space<vmem>>, vector<1x8x128xf32>
    %22 = vector.shape_cast %21 : vector<1x8x128xf32> to vector<8x128xf32>
    %23 = vector.shape_cast %20 : vector<8x128xf32> to vector<1x8x128xf32>
    tpu.vector_store %arg6[%c0_19, %c0_20, %c0_21], %23 {strides = array<i32>} : memref<1x8x128xf32, #tpu.memory_space<vmem>>, vector<1x8x128xf32>,
    return
  }
  func.func @transform_0(%arg0: i32, %arg1: i32) -> (i32, i32) {
    %c1_i32 = arith.constant 1 : i32
    %0 = arith.muli %arg0, %c1_i32 : i32
    %1 = arith.addi %0, %arg1 : i32
    %c1_i32_0 = arith.constant 1 : i32
    %2 = arith.minsi %1, %c1_i32_0 : i32
    %c0_i32 = arith.constant 0 : i32
    %c0_i32_1 = arith.constant 0 : i32
    return %c0_i32, %2 : i32, i32
  }
  func.func @transform_1(%arg0: i32, %arg1: i32) -> (i32, i32) {
    %c1_i32 = arith.constant 1 : i32
    %0 = arith.muli %arg0, %c1_i32 : i32
    %1 = arith.addi %0, %arg1 : i32
    %c1_i32_0 = arith.constant 1 : i32
    %2 = arith.minsi %1, %c1_i32_0 : i32
    %c0_i32 = arith.constant 0 : i32
    %c0_i32_1 = arith.constant 0 : i32
    return %c0_i32, %2 : i32, i32
  }
  func.func @transform_2(%arg0: i32, %arg1: i32) -> (i32, i32, i32) {
    %c0_i32 = arith.constant 0 : i32
    %c0_i32_0 = arith.constant 0 : i32
    %c0_i32_1 = arith.constant 0 : i32
    return %arg0, %c0_i32, %c0_i32_0 : i32, i32, i32
  }
  func.func @transform_3(%arg0: i32, %arg1: i32) -> (i32, i32, i32) {
    %c0_i32 = arith.constant 0 : i32
    %c0_i32_0 = arith.constant 0 : i32
    %c0_i32_1 = arith.constant 0 : i32
    return %arg0, %c0_i32, %c0_i32_0 : i32, i32, i32
  }
  func.func @transform_4(%arg0: i32, %arg1: i32) -> (i32, i32, i32) {
    %c0_i32 = arith.constant 0 : i32
    %c0_i32_0 = arith.constant 0 : i32
    %c0_i32_1 = arith.constant 0 : i32
    return %arg0, %c0_i32, %c0_i32_0 : i32, i32, i32
  }
}

</mosaic_0001>

<llo_original>
// kernel: generalized_dice_loss.1
$region0: #{generalized_dice_loss.1}
  #allocation0 [shape = 'u32[]', space=smem, size = 0x4, offset = 0x4, fixed_abs, tag = 'smem constant byte address 0x4 - core index']
  #allocation1 [shape = 'u32[72,128]{1,0:T(1,128)}', space=vmem, size = 0x9000, scoped, tag = 'internal scratch']
  %s0 = inlined_call_operand.vmem [shape: f32[8,256], index: 0, kind: input, shape index: {}]
  %s1 = inlined_call_operand.vmem [shape: f32[8,256], index: 1, kind: input, shape index: {}]
  %s2 = inlined_call_operand.vmem [shape: f32[2,8,128], index: 2, kind: output, shape index: {0}]
  %s3 = inlined_call_operand.vmem [shape: f32[2,8,128], index: 3, kind: output, shape index: {1}]
  %s4 = inlined_call_operand.vmem [shape: f32[2,8,128], index: 4, kind: output, shape index: {2}]
  %5 = xla_tuple %s2, %s3, %s4
  %s6 = sld [smem:[#allocation0]]
  $region61: #{generalized_dice_loss.1} parent=0
    _
  %s8 = ssub.s32 1, %s6
  %s9 = scalar_select 0, %s8, %s6
  loop: start=0, step=1, limit=4
  $region2: #{generalized_dice_loss.1} parent=0 // loop_pre_header
    _
  $region3: #{generalized_dice_loss.1} parent=0 // loop_header
    %s11 = sphi 0, %s15
    %p12 = scmp.ge.s32.totalorder %s11, 4
    %s18 = sphi 0, %s30
    %s19 = sphi 0, %s26
    %s20 = sphi 0, %s18
    %s21 = sphi 0, %s19
    %s22 = sphi 0, %s20
    %s23 = sphi 0, %s21
    %s39 = sphi 0, %s41
    %s42 = sphi 0, %s39
    %s43 = sphi 0, %s42
    %s59 = sphi 0, %s43
    %s71 = sphi 0, %s73
    %s74 = sphi 0, %s71
    %s75 = sphi 0, %s74
    %s91 = sphi 0, %s75
    %s97 = sphi 0, %s99
    %s100 = sphi 0, %s97
    %s101 = sphi 0, %s100
    %s117 = sphi 0, %s101
    %s123 = sphi 0, %s125
    %s126 = sphi 0, %s123
    %s127 = sphi 0, %s126
    %s143 = sphi 0, %s127
    %s149 = sphi 0, %s151
    %s152 = sphi 0, %s149
    %s153 = sphi 0, %s152
    %s169 = sphi 0, %s153
  $region4: #{generalized_dice_loss.1} parent=0 // loop_header_branch
    %14 = sbr.rel (%p12) target = $region8
  $region5: #{generalized_dice_loss.1} parent=0 // loop_body
    %s16 = ssub.s32 %s11, 1
    %s17 = ssub.s32 %s11, 2
    %s24 = sadd.s32 1, %s19
    %p25 = scmp.ge.s32.totalorder %s24, 1
    %s26 = scalar_select %p25, 0, %s24
    %s27 = sadd.s32 1, %s18
    %s28 = scalar_select %p25, %s27, %s18
    %p29 = scmp.ge.s32.totalorder %s28, 2
    %s30 = scalar_select %p29, 0, %s28
    %s31 = sadd.s32 %s18, %s19
    %p32 = scmp.lt.s32.totalorder %s31, 1
    %s33 = scalar_select %p32, %s31, 1
    %s34 = sadd.s32 %s30, %s26
    %p35 = scmp.lt.s32.totalorder %s34, 1
    %s36 = scalar_select %p35, %s34, 1
    %s37 = ssub.s32 %s33, %s36
    %p38 = scmp.eq.s32.totalorder %s37, 0
    %s40 = sadd.s32 %s39, 1
    %s41 = scalar_select %p38, %s39, %s40
    %p44 = pneg %p38
    %p45 = scmp.eq.s32.totalorder %s11, 1
    %p46 = por %p44, %p45
    %p47 = scmp.ne.s32.totalorder %s39, %s42
    %p48 = scmp.eq.s32.totalorder %s11, 0
    %p49 = por %p47, %p48
    %p50 = scmp.ne.s32.totalorder %s39, %s42
    %p51 = scmp.eq.s32.totalorder %s16, 1
    %p52 = por %p50, %p51
    %p53 = scmp.ne.s32.totalorder %s42, %s43
    %p54 = scmp.eq.s32.totalorder %s16, 0
    %p55 = por %p53, %p54
    %p56 = scmp.ne.s32.totalorder %s42, %s43
    %p57 = scmp.eq.s32.totalorder %s17, 1
    %p58 = por %p56, %p57
    %p60 = scmp.ne.s32.totalorder %s43, %s59
    %p61 = scmp.eq.s32.totalorder %s17, 0
    %p62 = por %p60, %p61
    %s63 = sadd.s32 %s18, %s19
    %p64 = scmp.lt.s32.totalorder %s63, 1
    %s65 = scalar_select %p64, %s63, 1
    %s66 = sadd.s32 %s30, %s26
    %p67 = scmp.lt.s32.totalorder %s66, 1
    %s68 = scalar_select %p67, %s66, 1
    %s69 = ssub.s32 %s65, %s68
    %p70 = scmp.eq.s32.totalorder %s69, 0
    %s72 = sadd.s32 %s71, 1
    %s73 = scalar_select %p70, %s71, %s72
    %p76 = pneg %p70
    %p77 = scmp.eq.s32.totalorder %s11, 1
    %p78 = por %p76, %p77
    %p79 = scmp.ne.s32.totalorder %s71, %s74
    %p80 = scmp.eq.s32.totalorder %s11, 0
    %p81 = por %p79, %p80
    %p82 = scmp.ne.s32.totalorder %s71, %s74
    %p83 = scmp.eq.s32.totalorder %s16, 1
    %p84 = por %p82, %p83
    %p85 = scmp.ne.s32.totalorder %s74, %s75
    %p86 = scmp.eq.s32.totalorder %s16, 0
    %p87 = por %p85, %p86
    %p88 = scmp.ne.s32.totalorder %s74, %s75
    %p89 = scmp.eq.s32.totalorder %s17, 1
    %p90 = por %p88, %p89
    %p92 = scmp.ne.s32.totalorder %s75, %s91
    %p93 = scmp.eq.s32.totalorder %s17, 0
    %p94 = por %p92, %p93
    %s95 = ssub.s32 %s18, %s30
    %p96 = scmp.eq.s32.totalorder %s95, 0
    %s98 = sadd.s32 %s97, 1
    %s99 = scalar_select %p96, %s97, %s98
    %p102 = pneg %p96
    %p103 = scmp.eq.s32.totalorder %s11, 1
    %p104 = por %p102, %p103
    %p105 = scmp.ne.s32.totalorder %s97, %s100
    %p106 = scmp.eq.s32.totalorder %s11, 0
    %p107 = por %p105, %p106
    %p108 = scmp.ne.s32.totalorder %s97, %s100
    %p109 = scmp.eq.s32.totalorder %s16, 1
    %p110 = por %p108, %p109
    %p111 = scmp.ne.s32.totalorder %s100, %s101
    %p112 = scmp.eq.s32.totalorder %s16, 0
    %p113 = por %p111, %p112
    %p114 = scmp.ne.s32.totalorder %s100, %s101
    %p115 = scmp.eq.s32.totalorder %s17, 1
    %p116 = por %p114, %p115
    %p118 = scmp.ne.s32.totalorder %s101, %s117
    %p119 = scmp.eq.s32.totalorder %s17, 0
    %p120 = por %p118, %p119
    %s121 = ssub.s32 %s18, %s30
    %p122 = scmp.eq.s32.totalorder %s121, 0
    %s124 = sadd.s32 %s123, 1
    %s125 = scalar_select %p122, %s123, %s124
    %p128 = pneg %p122
    %p129 = scmp.eq.s32.totalorder %s11, 1
    %p130 = por %p128, %p129
    %p131 = scmp.ne.s32.totalorder %s123, %s126
    %p132 = scmp.eq.s32.totalorder %s11, 0
    %p133 = por %p131, %p132
    %p134 = scmp.ne.s32.totalorder %s123, %s126
    %p135 = scmp.eq.s32.totalorder %s16, 1
    %p136 = por %p134, %p135
    %p137 = scmp.ne.s32.totalorder %s126, %s127
    %p138 = scmp.eq.s32.totalorder %s16, 0
    %p139 = por %p137, %p138
    %p140 = scmp.ne.s32.totalorder %s126, %s127
    %p141 = scmp.eq.s32.totalorder %s17, 1
    %p142 = por %p140, %p141
    %p144 = scmp.ne.s32.totalorder %s127, %s143
    %p145 = scmp.eq.s32.totalorder %s17, 0
    %p146 = por %p144, %p145
    %s147 = ssub.s32 %s18, %s30
    %p148 = scmp.eq.s32.totalorder %s147, 0
    %s150 = sadd.s32 %s149, 1
    %s151 = scalar_select %p148, %s149, %s150
    %p154 = pneg %p148
    %p155 = scmp.eq.s32.totalorder %s11, 1
    %p156 = por %p154, %p155
    %p157 = scmp.ne.s32.totalorder %s149, %s152
    %p158 = scmp.eq.s32.totalorder %s11, 0
    %p159 = por %p157, %p158
    %p160 = scmp.ne.s32.totalorder %s149, %s152
    %p161 = scmp.eq.s32.totalorder %s16, 1
    %p162 = por %p160, %p161
    %p163 = scmp.ne.s32.totalorder %s152, %s153
    %p164 = scmp.eq.s32.totalorder %s16, 0
    %p165 = por %p163, %p164
    %p166 = scmp.ne.s32.totalorder %s152, %s153
    %p167 = scmp.eq.s32.totalorder %s17, 1
    %p168 = por %p166, %p167
    %p170 = scmp.ne.s32.totalorder %s153, %s169
    %p171 = scmp.eq.s32.totalorder %s17, 0
    %p172 = por %p170, %p171
    %p173 = scmp.le.s32.totalorder 1, %s11
    %p174 = scmp.lt.s32.totalorder %s11, 3
    %p175 = pnand %p173, %p174
    %p176 = pneg %p175
    // Predicated region
    $region9: #{generalized_dice_loss.1} parent=5 // pred_check
      _
    $region10: #{generalized_dice_loss.1} parent=5 // pred_check_branch
      %178 = sbr.rel (%p175) target = $region12
    $region11: #{generalized_dice_loss.1} parent=5 // pred_region
      %s179 = ssub.s32 %s11, 1
    $region12: #{generalized_dice_loss.1} parent=5 // pred_fallthru
      _
    %p180 = scmp.lt.s32.totalorder %s11, 2
    // Predicated region
    $region13: #{generalized_dice_loss.1} parent=5 // pred_check
      %p181 = pneg %p180
    $region14: #{generalized_dice_loss.1} parent=5 // pred_check_branch
      %183 = sbr.rel (%p181) target = $region16
    $region15: #{generalized_dice_loss.1} parent=5 // pred_region
      // Predicated region
      $region17: #{generalized_dice_loss.1} parent=15 // pred_check
        %p184 = pneg %p49
      $region18: #{generalized_dice_loss.1} parent=15 // pred_check_branch
        %186 = sbr.rel (%p184) target = $region20
      $region19: #{generalized_dice_loss.1} parent=15 // pred_region
        %s187 = sadd.s32 %s18, %s19
        %p188 = scmp.lt.s32.totalorder %s187, 1
        %s189 = scalar_select %p188, %s187, 1
        %p190 = scmp.lt.s32.totalorder %s189, 1
        %s191 = scalar_select %p190, %s189, 1
        %s192 = smul.addr %s191, 8
        %s193 = scalar_lea.vmem %s0, %s192
        %s194 = sadd.s32 %s18, %s19
        %p195 = scmp.lt.s32.totalorder %s194, 1
        %s196 = scalar_select %p195, %s194, 1
      $region20: #{generalized_dice_loss.1} parent=15 // pred_fallthru
        _
      // Predicated region
      $region21: #{generalized_dice_loss.1} parent=15 // pred_check
        %p197 = pneg %p81
      $region22: #{generalized_dice_loss.1} parent=15 // pred_check_branch
        %199 = sbr.rel (%p197) target = $region24
      $region23: #{generalized_dice_loss.1} parent=15 // pred_region
        %s200 = sadd.s32 %s18, %s19
        %p201 = scmp.lt.s32.totalorder %s200, 1
        %s202 = scalar_select %p201, %s200, 1
        %p203 = scmp.lt.s32.totalorder %s202, 1
        %s204 = scalar_select %p203, %s202, 1
        %s205 = smul.addr %s204, 8
        %s206 = scalar_lea.vmem %s1, %s205
        %s207 = sadd.s32 %s18, %s19
        %p208 = scmp.lt.s32.totalorder %s207, 1
        %s209 = scalar_select %p208, %s207, 1
      $region24: #{generalized_dice_loss.1} parent=15 // pred_fallthru
        _
    $region16: #{generalized_dice_loss.1} parent=5 // pred_fallthru
      _
    %p210 = scmp.le.s32.totalorder 1, %s11
    %p211 = scmp.lt.s32.totalorder %s11, 3
    %p212 = pnand %p210, %p211
    %p213 = pneg %p212
    // Predicated region
    $region25: #{generalized_dice_loss.1} parent=5 // pred_check
      _
    $region26: #{generalized_dice_loss.1} parent=5 // pred_check_branch
      %215 = sbr.rel (%p212) target = $region28
    $region27: #{generalized_dice_loss.1} parent=5 // pred_region
      %s216 = ssub.s32 %s11, 1
      %s217 = sadd.s32 %s20, %s21
      %p218 = scmp.lt.s32.totalorder %s217, 1
      %s219 = scalar_select %p218, %s217, 1
      %p220 = scmp.lt.s32.totalorder %s219, 1
      %s221 = scalar_select %p220, %s219, 1
      %s222 = smul.addr %s221, 8
      %s223 = scalar_lea.vmem %s0, %s222
      %p224 = pneg %p55
      %p225 = pneg %p52
      %s226 = sadd.s32 %s20, %s21
      %p227 = scmp.lt.s32.totalorder %s226, 1
      %s228 = scalar_select %p227, %s226, 1
      %p229 = scmp.lt.s32.totalorder %s228, 1
      %s230 = scalar_select %p229, %s228, 1
      %s231 = smul.addr %s230, 8
      %s232 = scalar_lea.vmem %s1, %s231
      %p233 = pneg %p87
      %p234 = pneg %p84
      %p235 = pneg %p113
      %p236 = pneg %p110
      %p237 = scmp.lt.s32.totalorder %s20, 1
      %s238 = scalar_select %p237, %s20, 1
      %s239 = smul.addr %s238, 8
      %s240 = scalar_lea.vmem %s2, %s239
      %p241 = pneg %p139
      %p242 = pneg %p136
      %p243 = scmp.lt.s32.totalorder %s20, 1
      %s244 = scalar_select %p243, %s20, 1
      %s245 = smul.addr %s244, 8
      %s246 = scalar_lea.vmem %s3, %s245
      %p247 = pneg %p165
      %p248 = pneg %p162
      %p249 = scmp.lt.s32.totalorder %s20, 1
      %s250 = scalar_select %p249, %s20, 1
      %s251 = smul.addr %s250, 8
      %s252 = scalar_lea.vmem %s4, %s251
      %s253 = sadd.s32 %s20, %s21
      %p254 = scmp.lt.s32.totalorder %s253, 1
      %s255 = scalar_select %p254, %s253, 1
      %p256 = scmp.lt.s32.totalorder %s255, 1
      %s257 = scalar_select %p256, %s255, 1
      %s258 = smul.addr %s257, 8
      %s259 = scalar_lea.vmem %s0, %s258
      %s260 = sadd.s32 %s20, %s21
      %p261 = scmp.lt.s32.totalorder %s260, 1
      %s262 = scalar_select %p261, %s260, 1
      %s263 = sadd.s32 %s20, %s21
      %p264 = scmp.lt.s32.totalorder %s263, 1
      %s265 = scalar_select %p264, %s263, 1
      %p266 = scmp.lt.s32.totalorder %s265, 1
      %s267 = scalar_select %p266, %s265, 1
      %s268 = smul.addr %s267, 8
      %s269 = scalar_lea.vmem %s1, %s268
      %s270 = sadd.s32 %s20, %s21
      %p271 = scmp.lt.s32.totalorder %s270, 1
      %s272 = scalar_select %p271, %s270, 1
      %p273 = scmp.lt.s32.totalorder %s20, 1
      %s274 = scalar_select %p273, %s20, 1
      %s275 = smul.addr %s274, 8
      %s276 = scalar_lea.vmem %s2, %s275
      %p277 = scmp.lt.s32.totalorder %s20, 1
      %s278 = scalar_select %p277, %s20, 1
      %s279 = smul.addr %s278, 8
      %s280 = scalar_lea.vmem %s3, %s279
      %p281 = scmp.lt.s32.totalorder %s20, 1
      %s282 = scalar_select %p281, %s20, 1
      %s283 = smul.addr %s282, 8
      %s284 = scalar_lea.vmem %s4, %s283
      %p285 = scmp.eq.s32.totalorder %s21, 0
      // Predicated region
      $region29: #{generalized_dice_loss.1} parent=27 // pred_check
        %p286 = pneg %p285
      $region30: #{generalized_dice_loss.1} parent=27 // pred_check_branch
        %288 = sbr.rel (%p286) target = $region32
      $region31: #{generalized_dice_loss.1} parent=27 // pred_region
        %289 = vst [vmem:[%s276] sm:$0xff] 0.0
        %290 = vst [vmem:[%s280] sm:$0xff] 0.0
        %291 = vst [vmem:[%s284] sm:$0xff] 0.0
      $region32: #{generalized_dice_loss.1} parent=27 // pred_fallthru
        _
      %v292 = vld [vmem:[%s259] sm:$0xff]
      %v293 = vld [vmem:[%s269] sm:$0xff]
      %v294 = vld [vmem:[%s280] sm:$0xff]
      %v295 = vmul.f32 %v292, %v293
      %v296 = vadd.f32 %v294, %v295
      %297 = vst [vmem:[%s280] sm:$0xff] %v296
      %v298 = vld [vmem:[%s276] sm:$0xff]
      %v299 = vadd.f32 %v298, %v293
      %300 = vst [vmem:[%s276] sm:$0xff] %v299
      %v301 = vld [vmem:[%s284] sm:$0xff]
      %v302 = vadd.f32 %v301, %v292
      %303 = vst [vmem:[%s284] sm:$0xff] %v302
      %p304 = scmp.lt.s32.totalorder %s20, 1
      %s305 = scalar_select %p304, %s20, 1
      %s306 = smul.addr %s305, 8
      %s307 = scalar_lea.vmem %s2, %s306
      %p308 = scmp.lt.s32.totalorder %s20, 1
      %s309 = scalar_select %p308, %s20, 1
      %s310 = smul.addr %s309, 8
      %s311 = scalar_lea.vmem %s3, %s310
      %p312 = scmp.lt.s32.totalorder %s20, 1
      %s313 = scalar_select %p312, %s20, 1
      %s314 = smul.addr %s313, 8
      %s315 = scalar_lea.vmem %s4, %s314
      // Predicated region
      $region33: #{generalized_dice_loss.1} parent=27 // pred_check
        %p316 = pneg %p110
      $region34: #{generalized_dice_loss.1} parent=27 // pred_check_branch
        %318 = sbr.rel (%p316) target = $region36
      $region35: #{generalized_dice_loss.1} parent=27 // pred_region
        _
      $region36: #{generalized_dice_loss.1} parent=27 // pred_fallthru
        _
      // Predicated region
      $region37: #{generalized_dice_loss.1} parent=27 // pred_check
        %p319 = pneg %p136
      $region38: #{generalized_dice_loss.1} parent=27 // pred_check_branch
        %321 = sbr.rel (%p319) target = $region40
      $region39: #{generalized_dice_loss.1} parent=27 // pred_region
        _
      $region40: #{generalized_dice_loss.1} parent=27 // pred_fallthru
        _
      // Predicated region
      $region41: #{generalized_dice_loss.1} parent=27 // pred_check
        %p322 = pneg %p162
      $region42: #{generalized_dice_loss.1} parent=27 // pred_check_branch
        %324 = sbr.rel (%p322) target = $region44
      $region43: #{generalized_dice_loss.1} parent=27 // pred_region
        _
      $region44: #{generalized_dice_loss.1} parent=27 // pred_fallthru
        _
    $region28: #{generalized_dice_loss.1} parent=5 // pred_fallthru
      _
    %p325 = scmp.le.s32.totalorder 2, %s11
    // Predicated region
    $region45: #{generalized_dice_loss.1} parent=5 // pred_check
      %p326 = pneg %p325
    $region46: #{generalized_dice_loss.1} parent=5 // pred_check_branch
      %328 = sbr.rel (%p326) target = $region48
    $region47: #{generalized_dice_loss.1} parent=5 // pred_region
      %s329 = ssub.s32 %s11, 2
      // Predicated region
      $region49: #{generalized_dice_loss.1} parent=47 // pred_check
        %p330 = pneg %p116
      $region50: #{generalized_dice_loss.1} parent=47 // pred_check_branch
        %332 = sbr.rel (%p330) target = $region52
      $region51: #{generalized_dice_loss.1} parent=47 // pred_region
        %p333 = scmp.lt.s32.totalorder %s22, 1
        %s334 = scalar_select %p333, %s22, 1
        %s335 = smul.addr %s334, 8
        %s336 = scalar_lea.vmem %s2, %s335
      $region52: #{generalized_dice_loss.1} parent=47 // pred_fallthru
        _
      // Predicated region
      $region53: #{generalized_dice_loss.1} parent=47 // pred_check
        %p337 = pneg %p142
      $region54: #{generalized_dice_loss.1} parent=47 // pred_check_branch
        %339 = sbr.rel (%p337) target = $region56
      $region55: #{generalized_dice_loss.1} parent=47 // pred_region
        %p340 = scmp.lt.s32.totalorder %s22, 1
        %s341 = scalar_select %p340, %s22, 1
        %s342 = smul.addr %s341, 8
        %s343 = scalar_lea.vmem %s3, %s342
      $region56: #{generalized_dice_loss.1} parent=47 // pred_fallthru
        _
      // Predicated region
      $region57: #{generalized_dice_loss.1} parent=47 // pred_check
        %p344 = pneg %p168
      $region58: #{generalized_dice_loss.1} parent=47 // pred_check_branch
        %346 = sbr.rel (%p344) target = $region60
      $region59: #{generalized_dice_loss.1} parent=47 // pred_region
        %p347 = scmp.lt.s32.totalorder %s22, 1
        %s348 = scalar_select %p347, %s22, 1
        %s349 = smul.addr %s348, 8
        %s350 = scalar_lea.vmem %s4, %s349
      $region60: #{generalized_dice_loss.1} parent=47 // pred_fallthru
        _
    $region48: #{generalized_dice_loss.1} parent=5 // pred_fallthru
      _
  $region6: #{generalized_dice_loss.1} parent=0 // loop_footer
    %s15 = sadd.s32 1, %s11
  $region7: #{generalized_dice_loss.1} parent=0 // loop_footer_branch
    %10 = sbr.rel target = $region3
  $region8: #{generalized_dice_loss.1} parent=0 // loop_exit
    _

</llo_original>
